<compile_context>
chip_gen: v6e
topology: v6e:2x2x1
jax: 0.10.0
libtpu: 0.0.40
codegen_flags: <defaults>
</compile_context>

<pallas_src>
import jax
import jax.numpy as jnp
from jax import lax
from jax.experimental import pallas as pl
from jax.experimental.pallas import tpu as pltpu

CONTEXT_LENGTH = 2048
N_EMBEDDING = 8
N_HEAD = 4
HEAD_SIZE = N_EMBEDDING // N_HEAD  # 2
DEFAULT_BLOCK_S = 512


def _round_up(n, k):
    return ((n + k - 1) // k) * k


# ----------------------------------------------------------------------------
# Kernel 1: key / (scaled) query / value projections.
# ----------------------------------------------------------------------------
def _proj_kernel(x_ref, wk_ref, wq_ref, wv_ref, k_ref, q_ref, v_ref):
    x = x_ref[...]                                               # (S_pad, C)
    k_ref[...] = jnp.dot(x, wk_ref[...], preferred_element_type=jnp.float32)
    q_ref[...] = jnp.dot(x, wq_ref[...], preferred_element_type=jnp.float32)
    v_ref[...] = jnp.dot(x, wv_ref[...], preferred_element_type=jnp.float32)


# ----------------------------------------------------------------------------
# Kernel 2: blocked "attention" with causal block specialization.
# Works in transposed coordinates: att^T[jj, ii] = att[i_glob, j_glob].
# ----------------------------------------------------------------------------
def _attn_kernel(m_ref, q_ref, kt_ref, vt_ref, o_ref, acc_ref):
    i_blk = pl.program_id(1)
    j_blk = pl.program_id(2)
    n_j = pl.num_programs(2)
    ts = q_ref.shape[0]                                          # tile size
    m = m_ref[0]

    @pl.when(j_blk == 0)
    def _():
        acc_ref[...] = jnp.zeros_like(acc_ref)

    @pl.when(j_blk > i_blk)
    def _():
        # Strictly-upper blocks: i < j everywhere -> pure (already scaled) scores.
        s_t = jnp.dot(q_ref[...], kt_ref[...],
                      preferred_element_type=jnp.float32)        # (ts_j, ts_i)
        acc_ref[...] += jnp.dot(vt_ref[...], s_t,
                                preferred_element_type=jnp.float32)

    @pl.when(j_blk == i_blk)
    def _():
        # Diagonal blocks: fused mask + alibi in ONE select.
        s_t = jnp.dot(q_ref[...], kt_ref[...],
                      preferred_element_type=jnp.float32)        # (ts_j, ts_i)
        jj = lax.broadcasted_iota(jnp.int32, (ts, ts), 0)
        ii = lax.broadcasted_iota(jnp.int32, (ts, ts), 1)
        diff = jj - ii                                           # == j_glob - i_glob
        att_t = jnp.where(diff <= 0, m * diff.astype(jnp.float32), s_t)
        acc_ref[...] += jnp.dot(vt_ref[...], att_t,
                                preferred_element_type=jnp.float32)

    @pl.when(j_blk < i_blk)
    def _():
        # Strictly-lower blocks: att == m*(j - i) everywhere.  Rank-2 fast
        # path: out^T[h, ii] += m * (sum_j j*v[j,h] - i_glob * sum_j v[j,h]).
        v_t = vt_ref[...]                                        # (H, ts_j)
        j_row = (j_blk * ts
                 + lax.broadcasted_iota(jnp.int32, (1, ts), 1)).astype(jnp.float32)
        i_row = (i_blk * ts
                 + lax.broadcasted_iota(jnp.int32, (1, ts), 1)).astype(jnp.float32)
        sum_v = jnp.sum(v_t, axis=1, keepdims=True)              # (H, 1)
        wsum_v = jnp.sum(v_t * j_row, axis=1, keepdims=True)     # (H, 1)
        acc_ref[...] += m * (wsum_v - sum_v * i_row)             # (H, ts_i)

    @pl.when(j_blk == n_j - 1)
    def _():
        o_ref[...] = acc_ref[...].astype(o_ref.dtype)


# ----------------------------------------------------------------------------
# Wrapper
# ----------------------------------------------------------------------------
def head_forward(x, wk, wq, wv, m, *, block_s=None):
    """x: (B, S, C) f32; wk/wq/wv: PyTorch-layout (head_size, C); m: scalar."""
    x = x.astype(jnp.float32)
    B, S, C = x.shape
    H = wk.shape[0]
    scale = N_EMBEDDING ** (-0.5)

    # Sequence tiling (lane-dim constraint: tile must be a multiple of 128).
    if block_s is None:
        block_s = DEFAULT_BLOCK_S if S > DEFAULT_BLOCK_S else _round_up(S, 128)
    block_s = _round_up(block_s, 128)
    s_pad = _round_up(S, block_s)
    n_blk = s_pad // block_s

    if s_pad != S:
        # zero padding => padded value rows are 0 and contribute nothing.
        x = jnp.pad(x, ((0, 0), (0, s_pad - S), (0, 0)))

    wk_t = wk.T.astype(jnp.float32)                      # (C, H)
    wq_t = (wq.T * scale).astype(jnp.float32)            # fold 1/sqrt(n_emb) into q
    wv_t = wv.T.astype(jnp.float32)

    # ---- projections (tiny: S x 2 each) ----
    k, q, v = pl.pallas_call(
        _proj_kernel,
        out_shape=(
            jax.ShapeDtypeStruct((B, s_pad, H), jnp.float32),
            jax.ShapeDtypeStruct((B, s_pad, H), jnp.float32),
            jax.ShapeDtypeStruct((B, s_pad, H), jnp.float32),
        ),
        grid=(B,),
        in_specs=[
            pl.BlockSpec((None, s_pad, C), lambda b: (b, 0, 0)),
            pl.BlockSpec((C, H), lambda b: (0, 0)),
            pl.BlockSpec((C, H), lambda b: (0, 0)),
            pl.BlockSpec((C, H), lambda b: (0, 0)),
        ],
        out_specs=(
            pl.BlockSpec((None, s_pad, H), lambda b: (b, 0, 0)),
            pl.BlockSpec((None, s_pad, H), lambda b: (b, 0, 0)),
            pl.BlockSpec((None, s_pad, H), lambda b: (b, 0, 0)),
        ),
        compiler_params=pltpu.CompilerParams(dimension_semantics=("parallel",)),
    )(x, wk_t, wq_t, wv_t)

    # Layout plumbing only (no compute): lane-dense (H, S) views for the kernel.
    kt = jnp.swapaxes(k, 1, 2)                           # (B, H, S_pad)
    vt = jnp.swapaxes(v, 1, 2)                           # (B, H, S_pad)
    m_arr = jnp.reshape(jnp.asarray(m, dtype=jnp.float32), (1,))

    # ---- blocked attention: grid (B, i, j), j (reduction) last ----
    out_t = pl.pallas_call(
        _attn_kernel,
        out_shape=jax.ShapeDtypeStruct((B, H, s_pad), jnp.float32),
        grid=(B, n_blk, n_blk),
        in_specs=[
            pl.BlockSpec(memory_space=pltpu.MemorySpace.SMEM),                 # m
            pl.BlockSpec((None, block_s, H), lambda b, i, j: (b, j, 0)),       # q   (j)
            pl.BlockSpec((None, H, block_s), lambda b, i, j: (b, 0, i)),       # k^T (i)
            pl.BlockSpec((None, H, block_s), lambda b, i, j: (b, 0, j)),       # v^T (j)
        ],
        out_specs=pl.BlockSpec((None, H, block_s), lambda b, i, j: (b, 0, i)),
        scratch_shapes=[pltpu.VMEM((H, block_s), jnp.float32)],
        compiler_params=pltpu.CompilerParams(
            dimension_semantics=("parallel", "parallel", "arbitrary")),
    )(m_arr, q, kt, vt)

    # out^T -> out, drop padded rows.
    return jnp.swapaxes(out_t, 1, 2)[:, :S, :]


# ----------------------------------------------------------------------------
# Pure-JAX reference mirroring the PyTorch forward exactly.
# ----------------------------------------------------------------------------
def head_reference(x, wk, wq, wv, m):
    B, S, C = x.shape
    key = x @ wk.T
    query = x @ wq.T
    value = x @ wv.T
    att = jnp.einsum('bih,bjh->bij', key, query) * (N_EMBEDDING ** (-0.5))
    tril = jnp.tril(jnp.ones((S, S), jnp.float32))
    ar = jnp.arange(S)
    alibi = jnp.tril((ar[None, :] - ar[:, None]).astype(jnp.float32))
    att = jnp.where(tril != 0, 0.0, att) + m * alibi[None, :, :]
    return att @ value


if __name__ == "__main__":
    key0 = jax.random.PRNGKey(0)
    k_x, k_wk, k_wq, k_wv, k_x2 = jax.random.split(key0, 5)

    B, S, C = 2, 8, N_EMBEDDING
    H = HEAD_SIZE

    x = jax.random.normal(k_x, (B, S, C), dtype=jnp.float32)
    # nn.Linear(n_embedding, head_size, bias=False) -> weight shape (H, C)
    bound = 1.0 / (C ** 0.5)
    wk = jax.random.uniform(k_wk, (H, C), jnp.float32, -bound, bound)
    wq = jax.random.uniform(k_wq, (H, C), jnp.float32, -bound, bound)
    wv = jax.random.uniform(k_wv, (H, C), jnp.float32, -bound, bound)
    m = 0.5

    out = jax.block_until_ready(head_forward(x, wk, wq, wv, m))
    ref = head_reference(x, wk, wq, wv, m)
    assert out.shape == (B, S, H)
    assert jnp.allclose(out, ref, atol=1e-5, rtol=1e-5), "mismatch vs reference (S=8)"

    # Second (still small) check: multi-block grid exercises the strictly-lower
    # fast path, the diagonal fused select, the upper score-only path and the
    # padded tail (200 is not a multiple of the 128 tile).
    S2 = 200
    x2 = jax.random.normal(k_x2, (1, S2, C), dtype=jnp.float32)
    out2 = jax.block_until_ready(head_forward(x2, wk, wq, wv, 0.25, block_s=128))
    ref2 = head_reference(x2, wk, wq, wv, 0.25)
    assert out2.shape == (1, S2, H)
    assert jnp.allclose(out2, ref2, atol=1e-3, rtol=1e-3), "mismatch vs reference (S=200)"

    print("KERNEL_OK")
</pallas_src>

<mosaic_0001>
module attributes {stable_mosaic.version = 11 : i64} {
  func.func @_proj_kernel(%arg0: i32, %arg1: memref<1x128x8xf32, #tpu.memory_space<vmem>>, %arg2: memref<8x2xf32, #tpu.memory_space<vmem>>, %arg3: memref<8x2xf32, #tpu.memory_space<vmem>>, %arg4: memref<8x2xf32, #tpu.memory_space<vmem>>, %arg5: memref<1x128x2xf32, #tpu.memory_space<vmem>>, %arg6: memref<1x128x2xf32, #tpu.memory_space<vmem>>, %arg7: memref<1x128x2xf32, #tpu.memory_space<vmem>>) attributes {dimension_semantics = [#tpu.dimension_semantics<parallel>], iteration_bounds = array<i64: 2>, scalar_prefetch = 0 : i64, scratch_operands = 0 : i64, tpu.core_type = #tpu.core_type<tc>, window_params = [{transform_indices = @transform_0, window_bounds = array<i64: 1, 128, 8>}, {pipeline_mode = #tpu.pipeline_mode<synchronous>, transform_indices = @transform_1, window_bounds = array<i64: 8, 2>}, {pipeline_mode = #tpu.pipeline_mode<synchronous>, transform_indices = @transform_2, window_bounds = array<i64: 8, 2>}, {pipeline_mode = #tpu.pipeline_mode<synchronous>, transform_indices = @transform_3, window_bounds = array<i64: 8, 2>}, {transform_indices = @transform_4, window_bounds = array<i64: 1, 128, 2>}, {transform_indices = @transform_5, window_bounds = array<i64: 1, 128, 2>}, {transform_indices = @transform_6, window_bounds = array<i64: 1, 128, 2>}]} {
    %c0 = arith.constant 0 : index
    %c0_0 = arith.constant 0 : index
    %c0_1 = arith.constant 0 : index
    %0 = vector.load %arg1[%c0, %c0_0, %c0_1] : memref<1x128x8xf32, #tpu.memory_space<vmem>>, vector<1x128x8xf32>
    %1 = vector.shape_cast %0 : vector<1x128x8xf32> to vector<128x8xf32>
    %c0_2 = arith.constant 0 : index
    %c0_3 = arith.constant 0 : index
    %2 = vector.load %arg2[%c0_2, %c0_3] : memref<8x2xf32, #tpu.memory_space<vmem>>, vector<8x2xf32>
    %cst = arith.constant dense<0.000000e+00> : vector<128x2xf32>
    %3 = tpu.matmul %1, %2, %cst {dimension_numbers = #tpu.dot_dimension_numbers<[1], [0], [0], [1], [0, 0, 1, 1], [], []>} : vector<128x8xf32>, vector<8x2xf32>, vector<128x2xf32> -> vector<128x2xf32>
    %c0_4 = arith.constant 0 : index
    %c0_5 = arith.constant 0 : index
    %c0_6 = arith.constant 0 : index
    %4 = vector.load %arg5[%c0_4, %c0_5, %c0_6] : memref<1x128x2xf32, #tpu.memory_space<vmem>>, vector<1x128x2xf32>
    %5 = vector.shape_cast %4 : vector<1x128x2xf32> to vector<128x2xf32>
    %6 = vector.shape_cast %3 : vector<128x2xf32> to vector<1x128x2xf32>
    tpu.vector_store %arg5[%c0_4, %c0_5, %c0_6], %6 {strides = array<i32>} : memref<1x128x2xf32, #tpu.memory_space<vmem>>, vector<1x128x2xf32>,
    %c0_7 = arith.constant 0 : index
    %c0_8 = arith.constant 0 : index
    %7 = vector.load %arg3[%c0_7, %c0_8] : memref<8x2xf32, #tpu.memory_space<vmem>>, vector<8x2xf32>
    %cst_9 = arith.constant dense<0.000000e+00> : vector<128x2xf32>
    %8 = tpu.matmul %1, %7, %cst_9 {dimension_numbers = #tpu.dot_dimension_numbers<[1], [0], [0], [1], [0, 0, 1, 1], [], []>} : vector<128x8xf32>, vector<8x2xf32>, vector<128x2xf32> -> vector<128x2xf32>
    %c0_10 = arith.constant 0 : index
    %c0_11 = arith.constant 0 : index
    %c0_12 = arith.constant 0 : index
    %9 = vector.load %arg6[%c0_10, %c0_11, %c0_12] : memref<1x128x2xf32, #tpu.memory_space<vmem>>, vector<1x128x2xf32>
    %10 = vector.shape_cast %9 : vector<1x128x2xf32> to vector<128x2xf32>
    %11 = vector.shape_cast %8 : vector<128x2xf32> to vector<1x128x2xf32>
    tpu.vector_store %arg6[%c0_10, %c0_11, %c0_12], %11 {strides = array<i32>} : memref<1x128x2xf32, #tpu.memory_space<vmem>>, vector<1x128x2xf32>,
    %c0_13 = arith.constant 0 : index
    %c0_14 = arith.constant 0 : index
    %12 = vector.load %arg4[%c0_13, %c0_14] : memref<8x2xf32, #tpu.memory_space<vmem>>, vector<8x2xf32>
    %cst_15 = arith.constant dense<0.000000e+00> : vector<128x2xf32>
    %13 = tpu.matmul %1, %12, %cst_15 {dimension_numbers = #tpu.dot_dimension_numbers<[1], [0], [0], [1], [0, 0, 1, 1], [], []>} : vector<128x8xf32>, vector<8x2xf32>, vector<128x2xf32> -> vector<128x2xf32>
    %c0_16 = arith.constant 0 : index
    %c0_17 = arith.constant 0 : index
    %c0_18 = arith.constant 0 : index
    %14 = vector.load %arg7[%c0_16, %c0_17, %c0_18] : memref<1x128x2xf32, #tpu.memory_space<vmem>>, vector<1x128x2xf32>
    %15 = vector.shape_cast %14 : vector<1x128x2xf32> to vector<128x2xf32>
    %16 = vector.shape_cast %13 : vector<128x2xf32> to vector<1x128x2xf32>
    tpu.vector_store %arg7[%c0_16, %c0_17, %c0_18], %16 {strides = array<i32>} : memref<1x128x2xf32, #tpu.memory_space<vmem>>, vector<1x128x2xf32>,
    return
  }
  func.func @transform_0(%arg0: i32) -> (i32, i32, i32) {
    %c0_i32 = arith.constant 0 : i32
    %c0_i32_0 = arith.constant 0 : i32
    %c0_i32_1 = arith.constant 0 : i32
    return %arg0, %c0_i32, %c0_i32_0 : i32, i32, i32
  }
  func.func @transform_1(%arg0: i32) -> (i32, i32) {
    %c0_i32 = arith.constant 0 : i32
    %c0_i32_0 = arith.constant 0 : i32
    %c0_i32_1 = arith.constant 0 : i32
    return %c0_i32, %c0_i32_0 : i32, i32
  }
  func.func @transform_2(%arg0: i32) -> (i32, i32) {
    %c0_i32 = arith.constant 0 : i32
    %c0_i32_0 = arith.constant 0 : i32
    %c0_i32_1 = arith.constant 0 : i32
    return %c0_i32, %c0_i32_0 : i32, i32
  }
  func.func @transform_3(%arg0: i32) -> (i32, i32) {
    %c0_i32 = arith.constant 0 : i32
    %c0_i32_0 = arith.constant 0 : i32
    %c0_i32_1 = arith.constant 0 : i32
    return %c0_i32, %c0_i32_0 : i32, i32
  }
  func.func @transform_4(%arg0: i32) -> (i32, i32, i32) {
    %c0_i32 = arith.constant 0 : i32
    %c0_i32_0 = arith.constant 0 : i32
    %c0_i32_1 = arith.constant 0 : i32
    return %arg0, %c0_i32, %c0_i32_0 : i32, i32, i32
  }
  func.func @transform_5(%arg0: i32) -> (i32, i32, i32) {
    %c0_i32 = arith.constant 0 : i32
    %c0_i32_0 = arith.constant 0 : i32
    %c0_i32_1 = arith.constant 0 : i32
    return %arg0, %c0_i32, %c0_i32_0 : i32, i32, i32
  }
  func.func @transform_6(%arg0: i32) -> (i32, i32, i32) {
    %c0_i32 = arith.constant 0 : i32
    %c0_i32_0 = arith.constant 0 : i32
    %c0_i32_1 = arith.constant 0 : i32
    return %arg0, %c0_i32, %c0_i32_0 : i32, i32, i32
  }
}

</mosaic_0001>

<llo_original>
// kernel: tpu_custom_call.1
$region0: #{tpu_custom_call.1}
  #allocation0 [shape = 'u32[]', space=smem, size = 0x4, offset = 0x4, fixed_abs, tag = 'smem constant byte address 0x4 - core index']
  #allocation1 [shape = 'u32[144,128]{1,0:T(1,128)}', space=vmem, size = 0x12000, scoped, tag = 'internal scratch']
  %s0 = inlined_call_operand.vmem [shape: f32[2,128,8], index: 0, kind: input, shape index: {}]
  %s1 = inlined_call_operand.vmem [shape: f32[8,2], index: 1, kind: input, shape index: {}]
  %s2 = inlined_call_operand.vmem [shape: f32[8,2], index: 2, kind: input, shape index: {}]
  %s3 = inlined_call_operand.vmem [shape: f32[8,2], index: 3, kind: input, shape index: {}]
  %s4 = inlined_call_operand.vmem [shape: f32[2,128,2], index: 4, kind: output, shape index: {0}]
  %s5 = inlined_call_operand.vmem [shape: f32[2,128,2], index: 5, kind: output, shape index: {1}]
  %s6 = inlined_call_operand.vmem [shape: f32[2,128,2], index: 6, kind: output, shape index: {2}]
  %7 = xla_tuple %s4, %s5, %s6
  %s8 = sld [smem:[#allocation0]]
  $region65: #{tpu_custom_call.1} parent=0
    _
  %s10 = ssub.s32 1, %s8
  %s11 = scalar_select 0, %s10, %s8
  loop: start=0, step=1, limit=4
  $region2: #{tpu_custom_call.1} parent=0 // loop_pre_header
    _
  $region3: #{tpu_custom_call.1} parent=0 // loop_header
    %s13 = sphi 0, %s17
    %p14 = scmp.ge.s32.totalorder %s13, 4
    %s23 = sphi 0, %s25
    %s26 = sphi 0, %s23
    %s27 = sphi 0, %s26
    %s43 = sphi 0, %s27
    %s47 = sphi 0, %s47
    %s49 = sphi 0, %s47
    %s50 = sphi 0, %s49
    %s64 = sphi 0, %s50
    %s68 = sphi 0, %s68
    %s70 = sphi 0, %s68
    %s71 = sphi 0, %s70
    %s85 = sphi 0, %s71
    %s89 = sphi 0, %s89
    %s91 = sphi 0, %s89
    %s92 = sphi 0, %s91
    %s106 = sphi 0, %s92
    %s112 = sphi 0, %s114
    %s115 = sphi 0, %s112
    %s116 = sphi 0, %s115
    %s132 = sphi 0, %s116
    %s138 = sphi 0, %s140
    %s141 = sphi 0, %s138
    %s142 = sphi 0, %s141
    %s158 = sphi 0, %s142
    %s164 = sphi 0, %s166
    %s167 = sphi 0, %s164
    %s168 = sphi 0, %s167
    %s184 = sphi 0, %s168
  $region4: #{tpu_custom_call.1} parent=0 // loop_header_branch
    %16 = sbr.rel (%p14) target = $region8
  $region5: #{tpu_custom_call.1} parent=0 // loop_body
    %s18 = ssub.s32 %s13, 1
    %s19 = ssub.s32 %s13, 2
    %s20 = sadd.s32 %s13, 1
    %s21 = ssub.s32 %s13, %s20
    %p22 = scmp.eq.s32.totalorder %s21, 0
    %s24 = sadd.s32 %s23, 1
    %s25 = scalar_select %p22, %s23, %s24
    %p28 = pneg %p22
    %p29 = scmp.eq.s32.totalorder %s13, 1
    %p30 = por %p28, %p29
    %p31 = scmp.ne.s32.totalorder %s23, %s26
    %p32 = scmp.eq.s32.totalorder %s13, 0
    %p33 = por %p31, %p32
    %p34 = scmp.ne.s32.totalorder %s23, %s26
    %p35 = scmp.eq.s32.totalorder %s18, 1
    %p36 = por %p34, %p35
    %p37 = scmp.ne.s32.totalorder %s26, %s27
    %p38 = scmp.eq.s32.totalorder %s18, 0
    %p39 = por %p37, %p38
    %p40 = scmp.ne.s32.totalorder %s26, %s27
    %p41 = scmp.eq.s32.totalorder %s19, 1
    %p42 = por %p40, %p41
    %p44 = scmp.ne.s32.totalorder %s27, %s43
    %p45 = scmp.eq.s32.totalorder %s19, 0
    %p46 = por %p44, %p45
    %s48 = sadd.s32 %s47, 1
    %p51 = scmp.eq.s32.totalorder %s13, 1
    %p52 = scmp.ne.s32.totalorder %s47, %s49
    %p53 = scmp.eq.s32.totalorder %s13, 0
    %p54 = por %p52, %p53
    %p55 = scmp.ne.s32.totalorder %s47, %s49
    %p56 = scmp.eq.s32.totalorder %s18, 1
    %p57 = por %p55, %p56
    %p58 = scmp.ne.s32.totalorder %s49, %s50
    %p59 = scmp.eq.s32.totalorder %s18, 0
    %p60 = por %p58, %p59
    %p61 = scmp.ne.s32.totalorder %s49, %s50
    %p62 = scmp.eq.s32.totalorder %s19, 1
    %p63 = por %p61, %p62
    %p65 = scmp.ne.s32.totalorder %s50, %s64
    %p66 = scmp.eq.s32.totalorder %s19, 0
    %p67 = por %p65, %p66
    %s69 = sadd.s32 %s68, 1
    %p72 = scmp.eq.s32.totalorder %s13, 1
    %p73 = scmp.ne.s32.totalorder %s68, %s70
    %p74 = scmp.eq.s32.totalorder %s13, 0
    %p75 = por %p73, %p74
    %p76 = scmp.ne.s32.totalorder %s68, %s70
    %p77 = scmp.eq.s32.totalorder %s18, 1
    %p78 = por %p76, %p77
    %p79 = scmp.ne.s32.totalorder %s70, %s71
    %p80 = scmp.eq.s32.totalorder %s18, 0
    %p81 = por %p79, %p80
    %p82 = scmp.ne.s32.totalorder %s70, %s71
    %p83 = scmp.eq.s32.totalorder %s19, 1
    %p84 = por %p82, %p83
    %p86 = scmp.ne.s32.totalorder %s71, %s85
    %p87 = scmp.eq.s32.totalorder %s19, 0
    %p88 = por %p86, %p87
    %s90 = sadd.s32 %s89, 1
    %p93 = scmp.eq.s32.totalorder %s13, 1
    %p94 = scmp.ne.s32.totalorder %s89, %s91
    %p95 = scmp.eq.s32.totalorder %s13, 0
    %p96 = por %p94, %p95
    %p97 = scmp.ne.s32.totalorder %s89, %s91
    %p98 = scmp.eq.s32.totalorder %s18, 1
    %p99 = por %p97, %p98
    %p100 = scmp.ne.s32.totalorder %s91, %s92
    %p101 = scmp.eq.s32.totalorder %s18, 0
    %p102 = por %p100, %p101
    %p103 = scmp.ne.s32.totalorder %s91, %s92
    %p104 = scmp.eq.s32.totalorder %s19, 1
    %p105 = por %p103, %p104
    %p107 = scmp.ne.s32.totalorder %s92, %s106
    %p108 = scmp.eq.s32.totalorder %s19, 0
    %p109 = por %p107, %p108
    %s110 = ssub.s32 %s13, %s20
    %p111 = scmp.eq.s32.totalorder %s110, 0
    %s113 = sadd.s32 %s112, 1
    %s114 = scalar_select %p111, %s112, %s113
    %p117 = pneg %p111
    %p118 = scmp.eq.s32.totalorder %s13, 1
    %p119 = por %p117, %p118
    %p120 = scmp.ne.s32.totalorder %s112, %s115
    %p121 = scmp.eq.s32.totalorder %s13, 0
    %p122 = por %p120, %p121
    %p123 = scmp.ne.s32.totalorder %s112, %s115
    %p124 = scmp.eq.s32.totalorder %s18, 1
    %p125 = por %p123, %p124
    %p126 = scmp.ne.s32.totalorder %s115, %s116
    %p127 = scmp.eq.s32.totalorder %s18, 0
    %p128 = por %p126, %p127
    %p129 = scmp.ne.s32.totalorder %s115, %s116
    %p130 = scmp.eq.s32.totalorder %s19, 1
    %p131 = por %p129, %p130
    %p133 = scmp.ne.s32.totalorder %s116, %s132
    %p134 = scmp.eq.s32.totalorder %s19, 0
    %p135 = por %p133, %p134
    %s136 = ssub.s32 %s13, %s20
    %p137 = scmp.eq.s32.totalorder %s136, 0
    %s139 = sadd.s32 %s138, 1
    %s140 = scalar_select %p137, %s138, %s139
    %p143 = pneg %p137
    %p144 = scmp.eq.s32.totalorder %s13, 1
    %p145 = por %p143, %p144
    %p146 = scmp.ne.s32.totalorder %s138, %s141
    %p147 = scmp.eq.s32.totalorder %s13, 0
    %p148 = por %p146, %p147
    %p149 = scmp.ne.s32.totalorder %s138, %s141
    %p150 = scmp.eq.s32.totalorder %s18, 1
    %p151 = por %p149, %p150
    %p152 = scmp.ne.s32.totalorder %s141, %s142
    %p153 = scmp.eq.s32.totalorder %s18, 0
    %p154 = por %p152, %p153
    %p155 = scmp.ne.s32.totalorder %s141, %s142
    %p156 = scmp.eq.s32.totalorder %s19, 1
    %p157 = por %p155, %p156
    %p159 = scmp.ne.s32.totalorder %s142, %s158
    %p160 = scmp.eq.s32.totalorder %s19, 0
    %p161 = por %p159, %p160
    %s162 = ssub.s32 %s13, %s20
    %p163 = scmp.eq.s32.totalorder %s162, 0
    %s165 = sadd.s32 %s164, 1
    %s166 = scalar_select %p163, %s164, %s165
    %p169 = pneg %p163
    %p170 = scmp.eq.s32.totalorder %s13, 1
    %p171 = por %p169, %p170
    %p172 = scmp.ne.s32.totalorder %s164, %s167
    %p173 = scmp.eq.s32.totalorder %s13, 0
    %p174 = por %p172, %p173
    %p175 = scmp.ne.s32.totalorder %s164, %s167
    %p176 = scmp.eq.s32.totalorder %s18, 1
    %p177 = por %p175, %p176
    %p178 = scmp.ne.s32.totalorder %s167, %s168
    %p179 = scmp.eq.s32.totalorder %s18, 0
    %p180 = por %p178, %p179
    %p181 = scmp.ne.s32.totalorder %s167, %s168
    %p182 = scmp.eq.s32.totalorder %s19, 1
    %p183 = por %p181, %p182
    %p185 = scmp.ne.s32.totalorder %s168, %s184
    %p186 = scmp.eq.s32.totalorder %s19, 0
    %p187 = por %p185, %p186
    %p188 = scmp.le.s32.totalorder 1, %s13
    %p189 = scmp.lt.s32.totalorder %s13, 3
    %p190 = pnand %p188, %p189
    %p191 = pneg %p190
    // Predicated region
    $region9: #{tpu_custom_call.1} parent=5 // pred_check
      _
    $region10: #{tpu_custom_call.1} parent=5 // pred_check_branch
      %193 = sbr.rel (%p190) target = $region12
    $region11: #{tpu_custom_call.1} parent=5 // pred_region
      %s194 = ssub.s32 %s13, 1
      // Predicated region
      $region13: #{tpu_custom_call.1} parent=11 // pred_check
        %p195 = pneg %p60
      $region14: #{tpu_custom_call.1} parent=11 // pred_check_branch
        %197 = sbr.rel (%p195) target = $region16
      $region15: #{tpu_custom_call.1} parent=11 // pred_region
        _
      $region16: #{tpu_custom_call.1} parent=11 // pred_fallthru
        _
      // Predicated region
      $region17: #{tpu_custom_call.1} parent=11 // pred_check
        %p198 = pneg %p81
      $region18: #{tpu_custom_call.1} parent=11 // pred_check_branch
        %200 = sbr.rel (%p198) target = $region20
      $region19: #{tpu_custom_call.1} parent=11 // pred_region
        _
      $region20: #{tpu_custom_call.1} parent=11 // pred_fallthru
        _
      // Predicated region
      $region21: #{tpu_custom_call.1} parent=11 // pred_check
        %p201 = pneg %p102
      $region22: #{tpu_custom_call.1} parent=11 // pred_check_branch
        %203 = sbr.rel (%p201) target = $region24
      $region23: #{tpu_custom_call.1} parent=11 // pred_region
        _
      $region24: #{tpu_custom_call.1} parent=11 // pred_fallthru
        _
    $region12: #{tpu_custom_call.1} parent=5 // pred_fallthru
      _
    %p204 = scmp.lt.s32.totalorder %s13, 2
    // Predicated region
    $region25: #{tpu_custom_call.1} parent=5 // pred_check
      %p205 = pneg %p204
    $region26: #{tpu_custom_call.1} parent=5 // pred_check_branch
      %207 = sbr.rel (%p205) target = $region28
    $region27: #{tpu_custom_call.1} parent=5 // pred_region
      // Predicated region
      $region29: #{tpu_custom_call.1} parent=27 // pred_check
        %p208 = pneg %p33
      $region30: #{tpu_custom_call.1} parent=27 // pred_check_branch
        %210 = sbr.rel (%p208) target = $region32
      $region31: #{tpu_custom_call.1} parent=27 // pred_region
        %p211 = scmp.lt.s32.totalorder %s13, 1
        %s212 = scalar_select %p211, %s13, 1
        %s213 = smul.addr %s212, 16
        %s214 = smul.addr %s213, 8
        %s215 = scalar_lea.vmem %s0, %s214
      $region32: #{tpu_custom_call.1} parent=27 // pred_fallthru
        _
    $region28: #{tpu_custom_call.1} parent=5 // pred_fallthru
      _
    %p216 = scmp.le.s32.totalorder 1, %s13
    %p217 = scmp.lt.s32.totalorder %s13, 3
    %p218 = pnand %p216, %p217
    %p219 = pneg %p218
    // Predicated region
    $region33: #{tpu_custom_call.1} parent=5 // pred_check
      _
    $region34: #{tpu_custom_call.1} parent=5 // pred_check_branch
      %221 = sbr.rel (%p218) target = $region36
    $region35: #{tpu_custom_call.1} parent=5 // pred_region
      %s222 = ssub.s32 %s13, 1
      %p223 = scmp.lt.s32.totalorder %s18, 1
      %s224 = scalar_select %p223, %s18, 1
      %s225 = smul.addr %s224, 16
      %s226 = smul.addr %s225, 8
      %s227 = scalar_lea.vmem %s0, %s226
      %p228 = pneg %p39
      %p229 = pneg %p36
      %p230 = pneg %p60
      %p231 = pneg %p57
      %p232 = pneg %p81
      %p233 = pneg %p78
      %p234 = pneg %p102
      %p235 = pneg %p99
      %p236 = pneg %p128
      %p237 = pneg %p125
      %p238 = scmp.lt.s32.totalorder %s18, 1
      %s239 = scalar_select %p238, %s18, 1
      %s240 = smul.addr %s239, 16
      %s241 = smul.addr %s240, 8
      %s242 = scalar_lea.vmem %s4, %s241
      %p243 = pneg %p154
      %p244 = pneg %p151
      %p245 = scmp.lt.s32.totalorder %s18, 1
      %s246 = scalar_select %p245, %s18, 1
      %s247 = smul.addr %s246, 16
      %s248 = smul.addr %s247, 8
      %s249 = scalar_lea.vmem %s5, %s248
      %p250 = pneg %p180
      %p251 = pneg %p177
      %p252 = scmp.lt.s32.totalorder %s18, 1
      %s253 = scalar_select %p252, %s18, 1
      %s254 = smul.addr %s253, 16
      %s255 = smul.addr %s254, 8
      %s256 = scalar_lea.vmem %s6, %s255
      %p257 = scmp.lt.s32.totalorder %s18, 1
      %s258 = scalar_select %p257, %s18, 1
      %s259 = smul.addr %s258, 16
      %s260 = smul.addr %s259, 8
      %s261 = scalar_lea.vmem %s0, %s260
      %p262 = scmp.lt.s32.totalorder %s18, 1
      %s263 = scalar_select %p262, %s18, 1
      %s264 = smul.addr %s263, 16
      %s265 = smul.addr %s264, 8
      %s266 = scalar_lea.vmem %s4, %s265
      %p267 = scmp.lt.s32.totalorder %s18, 1
      %s268 = scalar_select %p267, %s18, 1
      %s269 = smul.addr %s268, 16
      %s270 = smul.addr %s269, 8
      %s271 = scalar_lea.vmem %s5, %s270
      %p272 = scmp.lt.s32.totalorder %s18, 1
      %s273 = scalar_select %p272, %s18, 1
      %s274 = smul.addr %s273, 16
      %s275 = smul.addr %s274, 8
      %s276 = scalar_lea.vmem %s6, %s275
      %v277 = vld [vmem:[%s261] sm:$0xff]
      %v278 = vld [vmem:[%s261 + $0x8] sm:$0xff]
      %v279 = vld [vmem:[%s261 + $0x10] sm:$0xff]
      %v280 = vld [vmem:[%s261 + $0x18] sm:$0xff]
      %v281 = vld [vmem:[%s261 + $0x20] sm:$0xff]
      %v282 = vld [vmem:[%s261 + $0x28] sm:$0xff]
      %v283 = vld [vmem:[%s261 + $0x30] sm:$0xff]
      %v284 = vld [vmem:[%s261 + $0x38] sm:$0xff]
      %v285 = vld [vmem:[%s261 + $0x40] sm:$0xff]
      %v286 = vld [vmem:[%s261 + $0x48] sm:$0xff]
      %v287 = vld [vmem:[%s261 + $0x50] sm:$0xff]
      %v288 = vld [vmem:[%s261 + $0x58] sm:$0xff]
      %v289 = vld [vmem:[%s261 + $0x60] sm:$0xff]
      %v290 = vld [vmem:[%s261 + $0x68] sm:$0xff]
      %v291 = vld [vmem:[%s261 + $0x70] sm:$0xff]
      %v292 = vld [vmem:[%s261 + $0x78] sm:$0xff]
      %v293 = vld [vmem:[%s1] sm:$0xff]
      %vm294 = vcmask 64512
      %v296 = vsel %vm294, %v277, 0
      %v299 = vsel %vm294, %v278, 0
      %v302 = vsel %vm294, %v279, 0
      %v305 = vsel %vm294, %v280, 0
      %v308 = vsel %vm294, %v281, 0
      %v311 = vsel %vm294, %v282, 0
      %v314 = vsel %vm294, %v283, 0
      %v317 = vsel %vm294, %v284, 0
      %v320 = vsel %vm294, %v285, 0
      %v323 = vsel %vm294, %v286, 0
      %v326 = vsel %vm294, %v287, 0
      %v329 = vsel %vm294, %v288, 0
      %v332 = vsel %vm294, %v289, 0
      %v335 = vsel %vm294, %v290, 0
      %v338 = vsel %vm294, %v291, 0
      %v341 = vsel %vm294, %v292, 0
      %343 = vmatprep.subr.mxu0 0.0
      %344 = vmatpush1.msra.mxu0 0.0
      %345 = vmatprep.subr.mxu0 0.0
      %346 = vmatpush1.msra.mxu0 0.0
      %347 = vmatprep.subr.mxu0 0.0
      %348 = vmatpush1.msra.mxu0 0.0
      %349 = vmatprep.subr.mxu0 0.0
      %350 = vmatpush1.msra.mxu0 0.0
      %351 = vmatprep.subr.mxu0 0.0
      %352 = vmatpush1.msra.mxu0 0.0
      %353 = vmatprep.subr.mxu0 0.0
      %354 = vmatpush1.msra.mxu0 0.0
      %355 = vmatprep.subr.mxu0 0.0
      %356 = vmatpush1.msra.mxu0 0.0
      %357 = vmatprep.subr.mxu0 0.0
      %358 = vmatpush1.msra.mxu0 0.0
      %359 = vmatprep.subr.mxu0 0.0
      %360 = vmatpush1.msra.mxu0 0.0
      %361 = vmatprep.subr.mxu0 0.0
      %362 = vmatpush1.msra.mxu0 0.0
      %363 = vmatprep.subr.mxu0 0.0
      %364 = vmatpush1.msra.mxu0 0.0
      %365 = vmatprep.subr.mxu0 0.0
      %366 = vmatpush1.msra.mxu0 0.0
      %367 = vmatprep.subr.mxu0 0.0
      %368 = vmatpush1.msra.mxu0 0.0
      %369 = vmatprep.subr.mxu0 0.0
      %370 = vmatpush1.msra.mxu0 0.0
      %371 = vmatprep.subr.mxu0 0.0
      %372 = vmatpush1.msra.mxu0 0.0
      %373 = vmatprep.subr.mxu0 0.0
      %374 = vmatpush1.msra.mxu0 %v293
      %375 = vmatprep.subr.mxu0 0.0
      %376 = vmatpush2.msra.mxu0 0.0
      %377 = vmatprep.subr.mxu0 0.0
      %378 = vmatpush2.msra.mxu0 0.0
      %379 = vmatprep.subr.mxu0 0.0
      %380 = vmatpush2.msra.mxu0 0.0
      %381 = vmatprep.subr.mxu0 0.0
      %382 = vmatpush2.msra.mxu0 0.0
      %383 = vmatprep.subr.mxu0 0.0
      %384 = vmatpush2.msra.mxu0 0.0
      %385 = vmatprep.subr.mxu0 0.0
      %386 = vmatpush2.msra.mxu0 0.0
      %387 = vmatprep.subr.mxu0 0.0
      %388 = vmatpush2.msra.mxu0 0.0
      %389 = vmatprep.subr.mxu0 0.0
      %390 = vmatpush2.msra.mxu0 0.0
      %391 = vmatprep.subr.mxu0 0.0
      %392 = vmatpush2.msra.mxu0 0.0
      %393 = vmatprep.subr.mxu0 0.0
      %394 = vmatpush2.msra.mxu0 0.0
      %395 = vmatprep.subr.mxu0 0.0
      %396 = vmatpush2.msra.mxu0 0.0
      %397 = vmatprep.subr.mxu0 0.0
      %398 = vmatpush2.msra.mxu0 0.0
      %399 = vmatprep.subr.mxu0 0.0
      %400 = vmatpush2.msra.mxu0 0.0
      %401 = vmatprep.subr.mxu0 0.0
      %402 = vmatpush2.msra.mxu0 0.0
      %403 = vmatprep.subr.mxu0 0.0
      %404 = vmatpush2.msra.mxu0 0.0
      %405 = vmatprep.subr.mxu0 0.0
      %406 = vmatpush2.msra.mxu0 0.0
      %407 = vmatprep.mubr.f32.mxu0 0.0
      %408 = vmatmul.mubr.f32.gmra.mxu0 %v296
      %v409 = vpop.f32.mrf.mxu0
      %v410 = vadd.f32 0.0, %v409
      %v411 = vpop.f32.mrf.mxu0
      %412 = vmatprep.mubr.f32.mxu0 0.0
      %413 = vmatmul.mubr.f32.gmra.mxu0 %v299
      %v414 = vpop.f32.mrf.mxu0
      %v415 = vadd.f32 0.0, %v414
      %v416 = vpop.f32.mrf.mxu0
      %417 = vmatprep.mubr.f32.mxu0 0.0
      %418 = vmatmul.mubr.f32.gmra.mxu0 %v302
      %v419 = vpop.f32.mrf.mxu0
      %v420 = vadd.f32 0.0, %v419
      %v421 = vpop.f32.mrf.mxu0
      %422 = vmatprep.mubr.f32.mxu0 0.0
      %423 = vmatmul.mubr.f32.gmra.mxu0 %v305
      %v424 = vpop.f32.mrf.mxu0
      %v425 = vadd.f32 0.0, %v424
      %v426 = vpop.f32.mrf.mxu0
      %427 = vmatprep.mubr.f32.mxu0 0.0
      %428 = vmatmul.mubr.f32.gmra.mxu0 %v308
      %v429 = vpop.f32.mrf.mxu0
      %v430 = vadd.f32 0.0, %v429
      %v431 = vpop.f32.mrf.mxu0
      %432 = vmatprep.mubr.f32.mxu0 0.0
      %433 = vmatmul.mubr.f32.gmra.mxu0 %v311
      %v434 = vpop.f32.mrf.mxu0
      %v435 = vadd.f32 0.0, %v434
      %v436 = vpop.f32.mrf.mxu0
      %437 = vmatprep.mubr.f32.mxu0 0.0
      %438 = vmatmul.mubr.f32.gmra.mxu0 %v314
      %v439 = vpop.f32.mrf.mxu0
      %v440 = vadd.f32 0.0, %v439
      %v441 = vpop.f32.mrf.mxu0
      %442 = vmatprep.mubr.f32.mxu0 0.0
      %443 = vmatmul.mubr.f32.gmra.mxu0 %v317
      %v444 = vpop.f32.mrf.mxu0
      %v445 = vadd.f32 0.0, %v444
      %v446 = vpop.f32.mrf.mxu0
      %447 = vmatprep.mubr.f32.mxu0 0.0
      %448 = vmatmul.mubr.f32.gmra.mxu0 %v320
      %v449 = vpop.f32.mrf.mxu0
      %v450 = vadd.f32 0.0, %v449
      %v451 = vpop.f32.mrf.mxu0
      %452 = vmatprep.mubr.f32.mxu0 0.0
      %453 = vmatmul.mubr.f32.gmra.mxu0 %v323
      %v454 = vpop.f32.mrf.mxu0
      %v455 = vadd.f32 0.0, %v454
      %v456 = vpop.f32.mrf.mxu0
      %457 = vmatprep.mubr.f32.mxu0 0.0
      %458 = vmatmul.mubr.f32.gmra.mxu0 %v326
      %v459 = vpop.f32.mrf.mxu0
      %v460 = vadd.f32 0.0, %v459
      %v461 = vpop.f32.mrf.mxu0
      %462 = vmatprep.mubr.f32.mxu0 0.0
      %463 = vmatmul.mubr.f32.gmra.mxu0 %v329
      %v464 = vpop.f32.mrf.mxu0
      %v465 = vadd.f32 0.0, %v464
      %v466 = vpop.f32.mrf.mxu0
      %467 = vmatprep.mubr.f32.mxu0 0.0
      %468 = vmatmul.mubr.f32.gmra.mxu0 %v332
      %v469 = vpop.f32.mrf.mxu0
      %v470 = vadd.f32 0.0, %v469
      %v471 = vpop.f32.mrf.mxu0
      %472 = vmatprep.mubr.f32.mxu0 0.0
      %473 = vmatmul.mubr.f32.gmra.mxu0 %v335
      %v474 = vpop.f32.mrf.mxu0
      %v475 = vadd.f32 0.0, %v474
      %v476 = vpop.f32.mrf.mxu0
      %477 = vmatprep.mubr.f32.mxu0 0.0
      %478 = vmatmul.mubr.f32.gmra.mxu0 %v338
      %v479 = vpop.f32.mrf.mxu0
      %v480 = vadd.f32 0.0, %v479
      %v481 = vpop.f32.mrf.mxu0
      %482 = vmatprep.mubr.f32.mxu0 0.0
      %483 = vmatmul.mubr.f32.gmra.mxu0 %v341
      %v484 = vpop.f32.mrf.mxu0
      %v485 = vadd.f32 0.0, %v484
      %v486 = vpop.f32.mrf.mxu0
      %487 = vdwg.mxu0
      %vm488 = vcmask 15360
      %489 = vst.msk [vmem:[%s266] sm:$0xff] %vm488, %v410
      %490 = vst.msk [vmem:[%s266 + $0x8] sm:$0xff] %vm488, %v415
      %491 = vst.msk [vmem:[%s266 + $0x10] sm:$0xff] %vm488, %v420
      %492 = vst.msk [vmem:[%s266 + $0x18] sm:$0xff] %vm488, %v425
      %493 = vst.msk [vmem:[%s266 + $0x20] sm:$0xff] %vm488, %v430
      %494 = vst.msk [vmem:[%s266 + $0x28] sm:$0xff] %vm488, %v435
      %495 = vst.msk [vmem:[%s266 + $0x30] sm:$0xff] %vm488, %v440
      %496 = vst.msk [vmem:[%s266 + $0x38] sm:$0xff] %vm488, %v445
      %497 = vst.msk [vmem:[%s266 + $0x40] sm:$0xff] %vm488, %v450
      %498 = vst.msk [vmem:[%s266 + $0x48] sm:$0xff] %vm488, %v455
      %499 = vst.msk [vmem:[%s266 + $0x50] sm:$0xff] %vm488, %v460
      %500 = vst.msk [vmem:[%s266 + $0x58] sm:$0xff] %vm488, %v465
      %501 = vst.msk [vmem:[%s266 + $0x60] sm:$0xff] %vm488, %v470
      %502 = vst.msk [vmem:[%s266 + $0x68] sm:$0xff] %vm488, %v475
      %503 = vst.msk [vmem:[%s266 + $0x70] sm:$0xff] %vm488, %v480
      %504 = vst.msk [vmem:[%s266 + $0x78] sm:$0xff] %vm488, %v485
      %v505 = vld [vmem:[%s2] sm:$0xff]
      %506 = vmatprep.subr.mxu0 0.0
      %507 = vmatpush1.msra.mxu0 0.0
      %508 = vmatprep.subr.mxu0 0.0
      %509 = vmatpush1.msra.mxu0 0.0
      %510 = vmatprep.subr.mxu0 0.0
      %511 = vmatpush1.msra.mxu0 0.0
      %512 = vmatprep.subr.mxu0 0.0
      %513 = vmatpush1.msra.mxu0 0.0
      %514 = vmatprep.subr.mxu0 0.0
      %515 = vmatpush1.msra.mxu0 0.0
      %516 = vmatprep.subr.mxu0 0.0
      %517 = vmatpush1.msra.mxu0 0.0
      %518 = vmatprep.subr.mxu0 0.0
      %519 = vmatpush1.msra.mxu0 0.0
      %520 = vmatprep.subr.mxu0 0.0
      %521 = vmatpush1.msra.mxu0 0.0
      %522 = vmatprep.subr.mxu0 0.0
      %523 = vmatpush1.msra.mxu0 0.0
      %524 = vmatprep.subr.mxu0 0.0
      %525 = vmatpush1.msra.mxu0 0.0
      %526 = vmatprep.subr.mxu0 0.0
      %527 = vmatpush1.msra.mxu0 0.0
      %528 = vmatprep.subr.mxu0 0.0
      %529 = vmatpush1.msra.mxu0 0.0
      %530 = vmatprep.subr.mxu0 0.0
      %531 = vmatpush1.msra.mxu0 0.0
      %532 = vmatprep.subr.mxu0 0.0
      %533 = vmatpush1.msra.mxu0 0.0
      %534 = vmatprep.subr.mxu0 0.0
      %535 = vmatpush1.msra.mxu0 0.0
      %536 = vmatprep.subr.mxu0 0.0
      %537 = vmatpush1.msra.mxu0 %v505
      %538 = vmatprep.subr.mxu0 0.0
      %539 = vmatpush2.msra.mxu0 0.0
      %540 = vmatprep.subr.mxu0 0.0
      %541 = vmatpush2.msra.mxu0 0.0
      %542 = vmatprep.subr.mxu0 0.0
      %543 = vmatpush2.msra.mxu0 0.0
      %544 = vmatprep.subr.mxu0 0.0
      %545 = vmatpush2.msra.mxu0 0.0
      %546 = vmatprep.subr.mxu0 0.0
      %547 = vmatpush2.msra.mxu0 0.0
      %548 = vmatprep.subr.mxu0 0.0
      %549 = vmatpush2.msra.mxu0 0.0
      %550 = vmatprep.subr.mxu0 0.0
      %551 = vmatpush2.msra.mxu0 0.0
      %552 = vmatprep.subr.mxu0 0.0
      %553 = vmatpush2.msra.mxu0 0.0
      %554 = vmatprep.subr.mxu0 0.0
      %555 = vmatpush2.msra.mxu0 0.0
      %556 = vmatprep.subr.mxu0 0.0
      %557 = vmatpush2.msra.mxu0 0.0
      %558 = vmatprep.subr.mxu0 0.0
      %559 = vmatpush2.msra.mxu0 0.0
      %560 = vmatprep.subr.mxu0 0.0
      %561 = vmatpush2.msra.mxu0 0.0
      %562 = vmatprep.subr.mxu0 0.0
      %563 = vmatpush2.msra.mxu0 0.0
      %564 = vmatprep.subr.mxu0 0.0
      %565 = vmatpush2.msra.mxu0 0.0
      %566 = vmatprep.subr.mxu0 0.0
      %567 = vmatpush2.msra.mxu0 0.0
      %568 = vmatprep.subr.mxu0 0.0
      %569 = vmatpush2.msra.mxu0 0.0
      %570 = vmatprep.mubr.f32.mxu0 0.0
      %571 = vmatmul.mubr.f32.gmra.mxu0 %v296
      %v572 = vpop.f32.mrf.mxu0
      %v573 = vadd.f32 0.0, %v572
      %v574 = vpop.f32.mrf.mxu0
      %575 = vmatprep.mubr.f32.mxu0 0.0
      %576 = vmatmul.mubr.f32.gmra.mxu0 %v299
      %v577 = vpop.f32.mrf.mxu0
      %v578 = vadd.f32 0.0, %v577
      %v579 = vpop.f32.mrf.mxu0
      %580 = vmatprep.mubr.f32.mxu0 0.0
      %581 = vmatmul.mubr.f32.gmra.mxu0 %v302
      %v582 = vpop.f32.mrf.mxu0
      %v583 = vadd.f32 0.0, %v582
      %v584 = vpop.f32.mrf.mxu0
      %585 = vmatprep.mubr.f32.mxu0 0.0
      %586 = vmatmul.mubr.f32.gmra.mxu0 %v305
      %v587 = vpop.f32.mrf.mxu0
      %v588 = vadd.f32 0.0, %v587
      %v589 = vpop.f32.mrf.mxu0
      %590 = vmatprep.mubr.f32.mxu0 0.0
      %591 = vmatmul.mubr.f32.gmra.mxu0 %v308
      %v592 = vpop.f32.mrf.mxu0
      %v593 = vadd.f32 0.0, %v592
      %v594 = vpop.f32.mrf.mxu0
      %595 = vmatprep.mubr.f32.mxu0 0.0
      %596 = vmatmul.mubr.f32.gmra.mxu0 %v311
      %v597 = vpop.f32.mrf.mxu0
      %v598 = vadd.f32 0.0, %v597
      %v599 = vpop.f32.mrf.mxu0
      %600 = vmatprep.mubr.f32.mxu0 0.0
      %601 = vmatmul.mubr.f32.gmra.mxu0 %v314
      %v602 = vpop.f32.mrf.mxu0
      %v603 = vadd.f32 0.0, %v602
      %v604 = vpop.f32.mrf.mxu0
      %605 = vmatprep.mubr.f32.mxu0 0.0
      %606 = vmatmul.mubr.f32.gmra.mxu0 %v317
      %v607 = vpop.f32.mrf.mxu0
      %v608 = vadd.f32 0.0, %v607
      %v609 = vpop.f32.mrf.mxu0
      %610 = vmatprep.mubr.f32.mxu0 0.0
      %611 = vmatmul.mubr.f32.gmra.mxu0 %v320
      %v612 = vpop.f32.mrf.mxu0
      %v613 = vadd.f32 0.0, %v612
      %v614 = vpop.f32.mrf.mxu0
      %615 = vmatprep.mubr.f32.mxu0 0.0
      %616 = vmatmul.mubr.f32.gmra.mxu0 %v323
      %v617 = vpop.f32.mrf.mxu0
      %v618 = vadd.f32 0.0, %v617
      %v619 = vpop.f32.mrf.mxu0
      %620 = vmatprep.mubr.f32.mxu0 0.0
      %621 = vmatmul.mubr.f32.gmra.mxu0 %v326
      %v622 = vpop.f32.mrf.mxu0
      %v623 = vadd.f32 0.0, %v622
      %v624 = vpop.f32.mrf.mxu0
      %625 = vmatprep.mubr.f32.mxu0 0.0
      %626 = vmatmul.mubr.f32.gmra.mxu0 %v329
      %v627 = vpop.f32.mrf.mxu0
      %v628 = vadd.f32 0.0, %v627
      %v629 = vpop.f32.mrf.mxu0
      %630 = vmatprep.mubr.f32.mxu0 0.0
      %631 = vmatmul.mubr.f32.gmra.mxu0 %v332
      %v632 = vpop.f32.mrf.mxu0
      %v633 = vadd.f32 0.0, %v632
      %v634 = vpop.f32.mrf.mxu0
      %635 = vmatprep.mubr.f32.mxu0 0.0
      %636 = vmatmul.mubr.f32.gmra.mxu0 %v335
      %v637 = vpop.f32.mrf.mxu0
      %v638 = vadd.f32 0.0, %v637
      %v639 = vpop.f32.mrf.mxu0
      %640 = vmatprep.mubr.f32.mxu0 0.0
      %641 = vmatmul.mubr.f32.gmra.mxu0 %v338
      %v642 = vpop.f32.mrf.mxu0
      %v643 = vadd.f32 0.0, %v642
      %v644 = vpop.f32.mrf.mxu0
      %645 = vmatprep.mubr.f32.mxu0 0.0
      %646 = vmatmul.mubr.f32.gmra.mxu0 %v341
      %v647 = vpop.f32.mrf.mxu0
      %v648 = vadd.f32 0.0, %v647
      %v649 = vpop.f32.mrf.mxu0
      %650 = vdwg.mxu0
      %651 = vst.msk [vmem:[%s271] sm:$0xff] %vm488, %v573
      %652 = vst.msk [vmem:[%s271 + $0x8] sm:$0xff] %vm488, %v578
      %653 = vst.msk [vmem:[%s271 + $0x10] sm:$0xff] %vm488, %v583
      %654 = vst.msk [vmem:[%s271 + $0x18] sm:$0xff] %vm488, %v588
      %655 = vst.msk [vmem:[%s271 + $0x20] sm:$0xff] %vm488, %v593
      %656 = vst.msk [vmem:[%s271 + $0x28] sm:$0xff] %vm488, %v598
      %657 = vst.msk [vmem:[%s271 + $0x30] sm:$0xff] %vm488, %v603
      %658 = vst.msk [vmem:[%s271 + $0x38] sm:$0xff] %vm488, %v608
      %659 = vst.msk [vmem:[%s271 + $0x40] sm:$0xff] %vm488, %v613
      %660 = vst.msk [vmem:[%s271 + $0x48] sm:$0xff] %vm488, %v618
      %661 = vst.msk [vmem:[%s271 + $0x50] sm:$0xff] %vm488, %v623
      %662 = vst.msk [vmem:[%s271 + $0x58] sm:$0xff] %vm488, %v628
      %663 = vst.msk [vmem:[%s271 + $0x60] sm:$0xff] %vm488, %v633
      %664 = vst.msk [vmem:[%s271 + $0x68] sm:$0xff] %vm488, %v638
      %665 = vst.msk [vmem:[%s271 + $0x70] sm:$0xff] %vm488, %v643
      %666 = vst.msk [vmem:[%s271 + $0x78] sm:$0xff] %vm488, %v648
      %v667 = vld [vmem:[%s3] sm:$0xff]
      %668 = vmatprep.subr.mxu0 0.0
      %669 = vmatpush1.msra.mxu0 0.0
      %670 = vmatprep.subr.mxu0 0.0
      %671 = vmatpush1.msra.mxu0 0.0
      %672 = vmatprep.subr.mxu0 0.0
      %673 = vmatpush1.msra.mxu0 0.0
      %674 = vmatprep.subr.mxu0 0.0
      %675 = vmatpush1.msra.mxu0 0.0
      %676 = vmatprep.subr.mxu0 0.0
      %677 = vmatpush1.msra.mxu0 0.0
      %678 = vmatprep.subr.mxu0 0.0
      %679 = vmatpush1.msra.mxu0 0.0
      %680 = vmatprep.subr.mxu0 0.0
      %681 = vmatpush1.msra.mxu0 0.0
      %682 = vmatprep.subr.mxu0 0.0
      %683 = vmatpush1.msra.mxu0 0.0
      %684 = vmatprep.subr.mxu0 0.0
      %685 = vmatpush1.msra.mxu0 0.0
      %686 = vmatprep.subr.mxu0 0.0
      %687 = vmatpush1.msra.mxu0 0.0
      %688 = vmatprep.subr.mxu0 0.0
      %689 = vmatpush1.msra.mxu0 0.0
      %690 = vmatprep.subr.mxu0 0.0
      %691 = vmatpush1.msra.mxu0 0.0
      %692 = vmatprep.subr.mxu0 0.0
      %693 = vmatpush1.msra.mxu0 0.0
      %694 = vmatprep.subr.mxu0 0.0
      %695 = vmatpush1.msra.mxu0 0.0
      %696 = vmatprep.subr.mxu0 0.0
      %697 = vmatpush1.msra.mxu0 0.0
      %698 = vmatprep.subr.mxu0 0.0
      %699 = vmatpush1.msra.mxu0 %v667
      %700 = vmatprep.subr.mxu0 0.0
      %701 = vmatpush2.msra.mxu0 0.0
      %702 = vmatprep.subr.mxu0 0.0
      %703 = vmatpush2.msra.mxu0 0.0
      %704 = vmatprep.subr.mxu0 0.0
      %705 = vmatpush2.msra.mxu0 0.0
      %706 = vmatprep.subr.mxu0 0.0
      %707 = vmatpush2.msra.mxu0 0.0
      %708 = vmatprep.subr.mxu0 0.0
      %709 = vmatpush2.msra.mxu0 0.0
      %710 = vmatprep.subr.mxu0 0.0
      %711 = vmatpush2.msra.mxu0 0.0
      %712 = vmatprep.subr.mxu0 0.0
      %713 = vmatpush2.msra.mxu0 0.0
      %714 = vmatprep.subr.mxu0 0.0
      %715 = vmatpush2.msra.mxu0 0.0
      %716 = vmatprep.subr.mxu0 0.0
      %717 = vmatpush2.msra.mxu0 0.0
      %718 = vmatprep.subr.mxu0 0.0
      %719 = vmatpush2.msra.mxu0 0.0
      %720 = vmatprep.subr.mxu0 0.0
      %721 = vmatpush2.msra.mxu0 0.0
      %722 = vmatprep.subr.mxu0 0.0
      %723 = vmatpush2.msra.mxu0 0.0
      %724 = vmatprep.subr.mxu0 0.0
      %725 = vmatpush2.msra.mxu0 0.0
      %726 = vmatprep.subr.mxu0 0.0
      %727 = vmatpush2.msra.mxu0 0.0
      %728 = vmatprep.subr.mxu0 0.0
      %729 = vmatpush2.msra.mxu0 0.0
      %730 = vmatprep.subr.mxu0 0.0
      %731 = vmatpush2.msra.mxu0 0.0
      %732 = vmatprep.mubr.f32.mxu0 0.0
      %733 = vmatmul.mubr.f32.gmra.mxu0 %v296
      %v734 = vpop.f32.mrf.mxu0
      %v735 = vadd.f32 0.0, %v734
      %v736 = vpop.f32.mrf.mxu0
      %737 = vmatprep.mubr.f32.mxu0 0.0
      %738 = vmatmul.mubr.f32.gmra.mxu0 %v299
      %v739 = vpop.f32.mrf.mxu0
      %v740 = vadd.f32 0.0, %v739
      %v741 = vpop.f32.mrf.mxu0
      %742 = vmatprep.mubr.f32.mxu0 0.0
      %743 = vmatmul.mubr.f32.gmra.mxu0 %v302
      %v744 = vpop.f32.mrf.mxu0
      %v745 = vadd.f32 0.0, %v744
      %v746 = vpop.f32.mrf.mxu0
      %747 = vmatprep.mubr.f32.mxu0 0.0
      %748 = vmatmul.mubr.f32.gmra.mxu0 %v305
      %v749 = vpop.f32.mrf.mxu0
      %v750 = vadd.f32 0.0, %v749
      %v751 = vpop.f32.mrf.mxu0
      %752 = vmatprep.mubr.f32.mxu0 0.0
      %753 = vmatmul.mubr.f32.gmra.mxu0 %v308
      %v754 = vpop.f32.mrf.mxu0
      %v755 = vadd.f32 0.0, %v754
      %v756 = vpop.f32.mrf.mxu0
      %757 = vmatprep.mubr.f32.mxu0 0.0
      %758 = vmatmul.mubr.f32.gmra.mxu0 %v311
      %v759 = vpop.f32.mrf.mxu0
      %v760 = vadd.f32 0.0, %v759
      %v761 = vpop.f32.mrf.mxu0
      %762 = vmatprep.mubr.f32.mxu0 0.0
      %763 = vmatmul.mubr.f32.gmra.mxu0 %v314
      %v764 = vpop.f32.mrf.mxu0
      %v765 = vadd.f32 0.0, %v764
      %v766 = vpop.f32.mrf.mxu0
      %767 = vmatprep.mubr.f32.mxu0 0.0
      %768 = vmatmul.mubr.f32.gmra.mxu0 %v317
      %v769 = vpop.f32.mrf.mxu0
      %v770 = vadd.f32 0.0, %v769
      %v771 = vpop.f32.mrf.mxu0
      %772 = vmatprep.mubr.f32.mxu0 0.0
      %773 = vmatmul.mubr.f32.gmra.mxu0 %v320
      %v774 = vpop.f32.mrf.mxu0
      %v775 = vadd.f32 0.0, %v774
      %v776 = vpop.f32.mrf.mxu0
      %777 = vmatprep.mubr.f32.mxu0 0.0
      %778 = vmatmul.mubr.f32.gmra.mxu0 %v323
      %v779 = vpop.f32.mrf.mxu0
      %v780 = vadd.f32 0.0, %v779
      %v781 = vpop.f32.mrf.mxu0
      %782 = vmatprep.mubr.f32.mxu0 0.0
      %783 = vmatmul.mubr.f32.gmra.mxu0 %v326
      %v784 = vpop.f32.mrf.mxu0
      %v785 = vadd.f32 0.0, %v784
      %v786 = vpop.f32.mrf.mxu0
      %787 = vmatprep.mubr.f32.mxu0 0.0
      %788 = vmatmul.mubr.f32.gmra.mxu0 %v329
      %v789 = vpop.f32.mrf.mxu0
      %v790 = vadd.f32 0.0, %v789
      %v791 = vpop.f32.mrf.mxu0
      %792 = vmatprep.mubr.f32.mxu0 0.0
      %793 = vmatmul.mubr.f32.gmra.mxu0 %v332
      %v794 = vpop.f32.mrf.mxu0
      %v795 = vadd.f32 0.0, %v794
      %v796 = vpop.f32.mrf.mxu0
      %797 = vmatprep.mubr.f32.mxu0 0.0
      %798 = vmatmul.mubr.f32.gmra.mxu0 %v335
      %v799 = vpop.f32.mrf.mxu0
      %v800 = vadd.f32 0.0, %v799
      %v801 = vpop.f32.mrf.mxu0
      %802 = vmatprep.mubr.f32.mxu0 0.0
      %803 = vmatmul.mubr.f32.gmra.mxu0 %v338
      %v804 = vpop.f32.mrf.mxu0
      %v805 = vadd.f32 0.0, %v804
      %v806 = vpop.f32.mrf.mxu0
      %807 = vmatprep.mubr.f32.mxu0 0.0
      %808 = vmatmul.mubr.f32.gmra.mxu0 %v341
      %v809 = vpop.f32.mrf.mxu0
      %v810 = vadd.f32 0.0, %v809
      %v811 = vpop.f32.mrf.mxu0
      %812 = vdwg.mxu0
      %813 = vst.msk [vmem:[%s276] sm:$0xff] %vm488, %v735
      %814 = vst.msk [vmem:[%s276 + $0x8] sm:$0xff] %vm488, %v740
      %815 = vst.msk [vmem:[%s276 + $0x10] sm:$0xff] %vm488, %v745
      %816 = vst.msk [vmem:[%s276 + $0x18] sm:$0xff] %vm488, %v750
      %817 = vst.msk [vmem:[%s276 + $0x20] sm:$0xff] %vm488, %v755
      %818 = vst.msk [vmem:[%s276 + $0x28] sm:$0xff] %vm488, %v760
      %819 = vst.msk [vmem:[%s276 + $0x30] sm:$0xff] %vm488, %v765
      %820 = vst.msk [vmem:[%s276 + $0x38] sm:$0xff] %vm488, %v770
      %821 = vst.msk [vmem:[%s276 + $0x40] sm:$0xff] %vm488, %v775
      %822 = vst.msk [vmem:[%s276 + $0x48] sm:$0xff] %vm488, %v780
      %823 = vst.msk [vmem:[%s276 + $0x50] sm:$0xff] %vm488, %v785
      %824 = vst.msk [vmem:[%s276 + $0x58] sm:$0xff] %vm488, %v790
      %825 = vst.msk [vmem:[%s276 + $0x60] sm:$0xff] %vm488, %v795
      %826 = vst.msk [vmem:[%s276 + $0x68] sm:$0xff] %vm488, %v800
      %827 = vst.msk [vmem:[%s276 + $0x70] sm:$0xff] %vm488, %v805
      %828 = vst.msk [vmem:[%s276 + $0x78] sm:$0xff] %vm488, %v810
      %p829 = scmp.lt.s32.totalorder %s18, 1
      %s830 = scalar_select %p829, %s18, 1
      %s831 = smul.addr %s830, 16
      %s832 = smul.addr %s831, 8
      %s833 = scalar_lea.vmem %s4, %s832
      %p834 = scmp.lt.s32.totalorder %s18, 1
      %s835 = scalar_select %p834, %s18, 1
      %s836 = smul.addr %s835, 16
      %s837 = smul.addr %s836, 8
      %s838 = scalar_lea.vmem %s5, %s837
      %p839 = scmp.lt.s32.totalorder %s18, 1
      %s840 = scalar_select %p839, %s18, 1
      %s841 = smul.addr %s840, 16
      %s842 = smul.addr %s841, 8
      %s843 = scalar_lea.vmem %s6, %s842
      // Predicated region
      $region37: #{tpu_custom_call.1} parent=35 // pred_check
        %p844 = pneg %p125
      $region38: #{tpu_custom_call.1} parent=35 // pred_check_branch
        %846 = sbr.rel (%p844) target = $region40
      $region39: #{tpu_custom_call.1} parent=35 // pred_region
        _
      $region40: #{tpu_custom_call.1} parent=35 // pred_fallthru
        _
      // Predicated region
      $region41: #{tpu_custom_call.1} parent=35 // pred_check
        %p847 = pneg %p151
      $region42: #{tpu_custom_call.1} parent=35 // pred_check_branch
        %849 = sbr.rel (%p847) target = $region44
      $region43: #{tpu_custom_call.1} parent=35 // pred_region
        _
      $region44: #{tpu_custom_call.1} parent=35 // pred_fallthru
        _
      // Predicated region
      $region45: #{tpu_custom_call.1} parent=35 // pred_check
        %p850 = pneg %p177
      $region46: #{tpu_custom_call.1} parent=35 // pred_check_branch
        %852 = sbr.rel (%p850) target = $region48
      $region47: #{tpu_custom_call.1} parent=35 // pred_region
        _
      $region48: #{tpu_custom_call.1} parent=35 // pred_fallthru
        _
    $region36: #{tpu_custom_call.1} parent=5 // pred_fallthru
      _
    %p853 = scmp.le.s32.totalorder 2, %s13
    // Predicated region
    $region49: #{tpu_custom_call.1} parent=5 // pred_check
      %p854 = pneg %p853
    $region50: #{tpu_custom_call.1} parent=5 // pred_check_branch
      %856 = sbr.rel (%p854) target = $region52
    $region51: #{tpu_custom_call.1} parent=5 // pred_region
      %s857 = ssub.s32 %s13, 2
      // Predicated region
      $region53: #{tpu_custom_call.1} parent=51 // pred_check
        %p858 = pneg %p131
      $region54: #{tpu_custom_call.1} parent=51 // pred_check_branch
        %860 = sbr.rel (%p858) target = $region56
      $region55: #{tpu_custom_call.1} parent=51 // pred_region
        %p861 = scmp.lt.s32.totalorder %s19, 1
        %s862 = scalar_select %p861, %s19, 1
        %s863 = smul.addr %s862, 16
        %s864 = smul.addr %s863, 8
        %s865 = scalar_lea.vmem %s4, %s864
      $region56: #{tpu_custom_call.1} parent=51 // pred_fallthru
        _
      // Predicated region
      $region57: #{tpu_custom_call.1} parent=51 // pred_check
        %p866 = pneg %p157
      $region58: #{tpu_custom_call.1} parent=51 // pred_check_branch
        %868 = sbr.rel (%p866) target = $region60
      $region59: #{tpu_custom_call.1} parent=51 // pred_region
        %p869 = scmp.lt.s32.totalorder %s19, 1
        %s870 = scalar_select %p869, %s19, 1
        %s871 = smul.addr %s870, 16
        %s872 = smul.addr %s871, 8
        %s873 = scalar_lea.vmem %s5, %s872
      $region60: #{tpu_custom_call.1} parent=51 // pred_fallthru
        _
      // Predicated region
      $region61: #{tpu_custom_call.1} parent=51 // pred_check
        %p874 = pneg %p183
      $region62: #{tpu_custom_call.1} parent=51 // pred_check_branch
        %876 = sbr.rel (%p874) target = $region64
      $region63: #{tpu_custom_call.1} parent=51 // pred_region
        %p877 = scmp.lt.s32.totalorder %s19, 1
        %s878 = scalar_select %p877, %s19, 1
        %s879 = smul.addr %s878, 16
        %s880 = smul.addr %s879, 8
        %s881 = scalar_lea.vmem %s6, %s880
      $region64: #{tpu_custom_call.1} parent=51 // pred_fallthru
        _
    $region52: #{tpu_custom_call.1} parent=5 // pred_fallthru
      _
  $region6: #{tpu_custom_call.1} parent=0 // loop_footer
    %s17 = sadd.s32 1, %s13
  $region7: #{tpu_custom_call.1} parent=0 // loop_footer_branch
    %12 = sbr.rel target = $region3
  $region8: #{tpu_custom_call.1} parent=0 // loop_exit
    _

</llo_original>
